<compile_context>
chip_gen: v5e
topology: v5e:2x2
jax: 0.10.0
libtpu: 0.0.40
codegen_flags: <defaults>
</compile_context>

<pallas_src>
import math

import jax
import jax.numpy as jnp
from jax.experimental import pallas as pl
from jax.experimental.pallas import tpu as pltpu

LANE = 128
LOG_BLOCK_BYTES = 4 * 1024 * 1024   # per-block input bytes for the log kernel
MSE_BLOCK_BYTES = 3 * 1024 * 1024   # per-input per-block bytes for the MSE kernel
MIN_PALLAS_ELEMS = 4096             # below this, plain jnp beats a pallas launch
VMEM_LIMIT_BYTES = 32 * 1024 * 1024  # safe on v5e/v6e (128 MiB phys) and v7x (64 MiB)


def _pick_rows(rows, row_elems, itemsize, max_bytes):
    """Pick a sublane-tile size: multiple of 8 (or == rows), sized to
    ~max_bytes, and giving >= 2 grid steps whenever rows allows it (v7x)."""
    if rows <= 8:
        return rows
    by_bytes = max(8, (max_bytes // (row_elems * itemsize)) // 8 * 8)
    by_split = max(8, (-(-rows // 2)) // 8 * 8)   # ~half the rows, mult of 8
    tile = min(by_bytes, by_split)
    if tile >= rows:
        return rows
    return tile


# ---------------------------------------------------------------------------
# Kernel 1: per-block, per-lane partial sums of log(x) over a (rows, cols)
#           matrix.  Partial row is replicated over 8 sublanes so the output
#           block is tile-aligned.
# ---------------------------------------------------------------------------
def _make_log_partial_kernel(block_rows, cols, valid_last_rows, need_mask):
    def kernel(x_ref, o_ref):
        x = x_ref[...].astype(jnp.float32)

        def write(vals):
            row = jnp.sum(jnp.log(vals), axis=0, keepdims=True)      # (1, cols)
            o_ref[0] = jnp.broadcast_to(row, (8, cols))

        if need_mask:
            is_last = pl.program_id(0) == pl.num_programs(0) - 1

            @pl.when(is_last)
            def _():
                rid = jax.lax.broadcasted_iota(jnp.int32, (block_rows, cols), 0)
                # OOB rows -> 1.0 BEFORE log (log(1) == 0, NaN-safe select)
                write(jnp.where(rid < valid_last_rows, x, jnp.float32(1.0)))

            @pl.when(jnp.logical_not(is_last))
            def _():
                write(x)
        else:
            write(x)

    return kernel


def _log_sum_pallas(a, *, max_block_bytes=LOG_BLOCK_BYTES):
    """sum(log(a)) for one array via Pallas, with no wrapper-side HBM copies."""
    n = int(a.size)
    if n % LANE == 0:
        mat = jnp.reshape(a, (-1, LANE))            # free (contiguous) reshape
    else:
        mat = jnp.reshape(a, (-1, a.shape[-1]))     # full last dim -> no pad/copy
    rows, cols = mat.shape
    block_rows = _pick_rows(rows, cols, mat.dtype.itemsize, max_block_bytes)
    n_blocks = pl.cdiv(rows, block_rows)
    valid_last = rows - (n_blocks - 1) * block_rows
    need_mask = valid_last != block_rows

    kernel = _make_log_partial_kernel(block_rows, cols, valid_last, need_mask)

    partials = pl.pallas_call(
        kernel,
        out_shape=jax.ShapeDtypeStruct((n_blocks, 8, cols), jnp.float32),
        grid=(n_blocks,),
        in_specs=[pl.BlockSpec((block_rows, cols), lambda i: (i, 0))],
        out_specs=pl.BlockSpec((1, 8, cols), lambda i: (i, 0, 0)),
        compiler_params=pltpu.CompilerParams(
            dimension_semantics=("parallel",),
            vmem_limit_bytes=VMEM_LIMIT_BYTES),
        cost_estimate=pl.CostEstimate(
            flops=2 * n, transcendentals=n,
            bytes_accessed=mat.dtype.itemsize * rows * cols
                           + 4 * n_blocks * 8 * cols),
    )(mat)
    # every partial row is replicated over the 8 sublanes -> read sublane 0
    return jnp.sum(partials[:, 0, :])


def log_sum_scaled(arrays, scale, *, min_pallas_elems=MIN_PALLAS_ELEMS):
    """scale * sum_i sum(log(arrays[i]))."""
    total = jnp.float32(0.0)
    for a in arrays:
        if int(a.size) >= min_pallas_elems:
            total = total + _log_sum_pallas(a)
        else:
            total = total + jnp.sum(jnp.log(a.astype(jnp.float32)))
    return total * jnp.float32(scale)


# ---------------------------------------------------------------------------
# Kernel 2: per-(batch, row-tile) partial sums of the squared RGB error.
#           diff-first + folded coefficients: the -0.5 offsets and the *255
#           cancel in the difference, so 255*yuv2rgb(c) - 255*yuv2rgb(t)
#           == (255*M) @ (c - t).
# ---------------------------------------------------------------------------
def _make_rgb_sqerr_kernel(s_tile, cols, valid_last_rows, need_mask):
    C_Y = 255.0
    C_RV = 255.0 * 1.14
    C_GU = 255.0 * 0.394
    C_GV = 255.0 * 0.581
    C_BU = 255.0 * 2.032

    def kernel(c_ref, t_ref, o_ref):
        d = c_ref[...].astype(jnp.float32) - t_ref[...].astype(jnp.float32)
        dY, dU, dV = d[0, 0], d[0, 1], d[0, 2]            # each (s_tile, cols)
        dY255 = C_Y * dY
        dr = dY255 + C_RV * dV
        dg = dY255 - C_GU * dU - C_GV * dV
        db = dY255 + C_BU * dU
        contrib = dr * dr + dg * dg + db * db

        def write(v):
            row = jnp.sum(v, axis=0, keepdims=True)        # (1, cols)
            o_ref[0, 0] = jnp.broadcast_to(row, (8, cols))

        if need_mask:
            is_last = pl.program_id(1) == pl.num_programs(1) - 1

            @pl.when(is_last)
            def _():
                rid = jax.lax.broadcasted_iota(jnp.int32, (s_tile, cols), 0)
                write(jnp.where(rid < valid_last_rows, contrib, jnp.float32(0.0)))

            @pl.when(jnp.logical_not(is_last))
            def _():
                write(contrib)
        else:
            write(contrib)

    return kernel


def rgb_mse(colored_img, target, *, min_pallas_elems=MIN_PALLAS_ELEMS,
            max_block_bytes=MSE_BLOCK_BYTES):
    """mean((yuv_to_rgb(colored)*255 - yuv_to_rgb(target)*255)**2)."""
    N, C, H, W = target.shape
    assert C == 3 and colored_img.shape == target.shape
    hw = H * W
    total = N * 3 * hw

    if total < min_pallas_elems:
        # tiny images: XLA's fused reduce beats a pallas launch
        d = colored_img.astype(jnp.float32) - target.astype(jnp.float32)
        dY, dU, dV = d[:, 0], d[:, 1], d[:, 2]
        dr = 255.0 * (dY + 1.14 * dV)
        dg = 255.0 * (dY - 0.394 * dU - 0.581 * dV)
        db = 255.0 * (dY + 2.032 * dU)
        return jnp.sum(dr * dr + dg * dg + db * db) / jnp.float32(total)

    if hw % LANE == 0:
        rows, cols = hw // LANE, LANE            # lane-dense fast path
    else:
        rows, cols = H, W                        # full-W blocks: no pad / no copy
    c = jnp.reshape(colored_img, (N, 3, rows, cols))   # free reshapes
    t = jnp.reshape(target, (N, 3, rows, cols))

    itemsize = max(c.dtype.itemsize, t.dtype.itemsize)
    s_tile = _pick_rows(rows, 3 * cols, itemsize, max_block_bytes)
    n_s = pl.cdiv(rows, s_tile)
    valid_last = rows - (n_s - 1) * s_tile
    need_mask = valid_last != s_tile

    kernel = _make_rgb_sqerr_kernel(s_tile, cols, valid_last, need_mask)

    partials = pl.pallas_call(
        kernel,
        out_shape=jax.ShapeDtypeStruct((N, n_s, 8, cols), jnp.float32),
        grid=(N, n_s),
        in_specs=[
            pl.BlockSpec((1, 3, s_tile, cols), lambda b, s: (b, 0, s, 0)),
            pl.BlockSpec((1, 3, s_tile, cols), lambda b, s: (b, 0, s, 0)),
        ],
        out_specs=pl.BlockSpec((1, 1, 8, cols), lambda b, s: (b, s, 0, 0)),
        compiler_params=pltpu.CompilerParams(
            dimension_semantics=("parallel", "parallel"),
            vmem_limit_bytes=VMEM_LIMIT_BYTES),
        cost_estimate=pl.CostEstimate(
            flops=20 * total, transcendentals=0,
            bytes_accessed=2 * total * itemsize + 4 * N * n_s * 8 * cols),
    )(c, t)
    # each partial row replicated over 8 sublanes -> read sublane 0
    return jnp.sum(partials[:, :, 0, :]) / jnp.float32(total)


# ---------------------------------------------------------------------------
# RateDistortionLoss forward
# ---------------------------------------------------------------------------
def rate_distortion_loss(epoch, output, target, Y, UV, lmbda=0.01):
    N, _, H, W = target.shape
    num_pixels = N * H * W
    scale = 1.0 / (-math.log(2) * num_pixels)

    out = {}
    out["bpp_loss"] = log_sum_scaled(list(output["likelihoods"].values()), scale)
    mse = rgb_mse(output["colored_img"], target)
    out["rec_color_mse_loss"] = mse
    out["task_loss"] = mse
    out["loss"] = lmbda * (mse + mse / 100.0) / 1.7 + out["bpp_loss"]
    return out


if __name__ == "__main__":
    key = jax.random.PRNGKey(0)
    ks = jax.random.split(key, 7)

    # Shapes chosen small but above the jnp-fallback threshold so every Pallas
    # path actually executes.
    N, C, H, W = 2, 3, 64, 64                 # hw = 4096 -> lane-dense path
    target = jax.random.uniform(ks[0], (N, C, H, W), dtype=jnp.float32)
    colored_img = jax.random.uniform(ks[1], (N, C, H, W), dtype=jnp.float32)

    lik_y = jax.random.uniform(ks[2], (N, 32, 16, 16), dtype=jnp.float32,
                               minval=0.05, maxval=1.0)   # 16384 elems
    lik_z = jax.random.uniform(ks[3], (N, 32, 8, 8), dtype=jnp.float32,
                               minval=0.05, maxval=1.0)   # 4096 elems

    output = {"likelihoods": {"y": lik_y, "z": lik_z}, "colored_img": colored_img}
    Y_in = jnp.zeros((N, 1, H, W), jnp.float32)    # unused by forward (parity)
    UV_in = jnp.zeros((N, 2, H, W), jnp.float32)

    result = rate_distortion_loss(epoch=0, output=output, target=target,
                                  Y=Y_in, UV=UV_in, lmbda=0.01)
    jax.block_until_ready(result["loss"])

    # ---------------- reference check in plain JAX ----------------
    def _yuv2rgb(x):
        Yc, U, V = x[:, 0], x[:, 1] - 0.5, x[:, 2] - 0.5
        return jnp.stack([Yc + 1.14 * V,
                          Yc - 0.394 * U - 0.581 * V,
                          Yc + 2.032 * U], axis=1)

    ref_bpp = sum(jnp.sum(jnp.log(l)) / (-math.log(2) * (N * H * W))
                  for l in output["likelihoods"].values())
    ref_mse = jnp.mean((_yuv2rgb(colored_img) * 255 - _yuv2rgb(target) * 255) ** 2)
    ref_loss = 0.01 * (ref_mse + ref_mse / 100.0) / 1.7 + ref_bpp

    assert jnp.allclose(result["bpp_loss"], ref_bpp, rtol=1e-4, atol=1e-4)
    assert jnp.allclose(result["rec_color_mse_loss"], ref_mse, rtol=1e-4, atol=1e-2)
    assert jnp.allclose(result["loss"], ref_loss, rtol=1e-4, atol=1e-2)

    # -------- extra checks: non-lane-aligned + masked-tail code paths --------
    # hw % 128 != 0 -> full-width blocks, masked last row-tile
    t2 = jax.random.uniform(ks[4], (2, 3, 50, 50), dtype=jnp.float32)
    c2 = jax.random.uniform(ks[5], (2, 3, 50, 50), dtype=jnp.float32)
    mse2 = rgb_mse(c2, t2)
    ref_mse2 = jnp.mean((_yuv2rgb(c2) * 255 - _yuv2rgb(t2) * 255) ** 2)
    assert jnp.allclose(mse2, ref_mse2, rtol=1e-4, atol=1e-2)

    # size % 128 != 0 likelihoods -> (rows, last_dim) layout, masked tail
    lik2 = jax.random.uniform(ks[6], (4, 9, 13, 17), dtype=jnp.float32,
                              minval=0.05, maxval=1.0)    # 7956 elems
    ls2 = log_sum_scaled([lik2], 1.0)
    assert jnp.allclose(ls2, jnp.sum(jnp.log(lik2)), rtol=1e-4, atol=1e-3)

    print("KERNEL_OK")
</pallas_src>

<mosaic_0001>
module attributes {stable_mosaic.version = 11 : i64} {
  func.func @kernel(%arg0: i32, %arg1: memref<64x128xf32, #tpu.memory_space<vmem>>, %arg2: memref<1x8x128xf32, #tpu.memory_space<vmem>>) attributes {dimension_semantics = [#tpu.dimension_semantics<parallel>], iteration_bounds = array<i64: 2>, scalar_prefetch = 0 : i64, scratch_operands = 0 : i64, tpu.core_type = #tpu.core_type<tc>, window_params = [{transform_indices = @transform_0, window_bounds = array<i64: 64, 128>}, {transform_indices = @transform_1, window_bounds = array<i64: 1, 8, 128>}]} {
    %c0 = arith.constant 0 : index
    %c0_0 = arith.constant 0 : index
    %0 = vector.load %arg1[%c0, %c0_0] : memref<64x128xf32, #tpu.memory_space<vmem>>, vector<64x128xf32>
    %1 = math.log %0 : vector<64x128xf32>
    %cst = arith.constant dense<0.000000e+00> : vector<128xf32>
    %2 = vector.multi_reduction <add>, %1, %cst [0] : vector<64x128xf32> to vector<128xf32>
    %3 = vector.shape_cast %2 : vector<128xf32> to vector<1x128xf32>
    %4 = vector.shape_cast %3 : vector<1x128xf32> to vector<1x128xf32>
    %5 = vector.broadcast %4 : vector<1x128xf32> to vector<8x128xf32>
    %c0_1 = arith.constant 0 : index
    %c0_2 = arith.constant 0 : index
    %c0_3 = arith.constant 0 : index
    %6 = vector.load %arg2[%c0_1, %c0_2, %c0_3] : memref<1x8x128xf32, #tpu.memory_space<vmem>>, vector<1x8x128xf32>
    %7 = vector.shape_cast %6 : vector<1x8x128xf32> to vector<8x128xf32>
    %8 = vector.shape_cast %5 : vector<8x128xf32> to vector<1x8x128xf32>
    tpu.vector_store %arg2[%c0_1, %c0_2, %c0_3], %8 {strides = array<i32>} : memref<1x8x128xf32, #tpu.memory_space<vmem>>, vector<1x8x128xf32>,
    return
  }
  func.func @transform_0(%arg0: i32) -> (i32, i32) {
    %c0_i32 = arith.constant 0 : i32
    %c0_i32_0 = arith.constant 0 : i32
    return %arg0, %c0_i32 : i32, i32
  }
  func.func @transform_1(%arg0: i32) -> (i32, i32, i32) {
    %c0_i32 = arith.constant 0 : i32
    %c0_i32_0 = arith.constant 0 : i32
    %c0_i32_1 = arith.constant 0 : i32
    return %arg0, %c0_i32, %c0_i32_0 : i32, i32, i32
  }
}

</mosaic_0001>

<llo_original>
// kernel: tpu_custom_call.1
$region0: #{tpu_custom_call.1}
  #allocation0 [shape = 'u32[]', space=smem, size = 0x4, offset = 0x4, fixed_abs, tag = 'smem constant byte address 0x4 - core index']
  #allocation1 [shape = 'u32[72,128]{1,0:T(1,128)}', space=vmem, size = 0x9000, scoped, tag = 'internal scratch']
  %s0 = inlined_call_operand.hbm [shape: f32[128,128], index: 0, kind: input, shape index: {}]
  %s1 = inlined_call_operand.hbm [shape: f32[2,8,128], index: 1, kind: output, shape index: {}]
  %s2 = sld [smem:[#allocation0]]
  $region41: #{tpu_custom_call.1} parent=0
    _
  %s4 = ssub.s32 1, %s2
  %s5 = scalar_select 0, %s4, %s2
  $region1: #{tpu_custom_call.1} parent=0
    #allocation2 [shape = 'u8[65536]{0}', space=vmem, size = 0x10000, scoped, tag = 'input window, operand 0']
    #allocation3 [shape = 's32[2]{0}', space=sflag, size = 0x8, scoped, tag = 'scoped memory for tpu_custom_call.1']
    #allocation4 [shape = 's32[2]{0}', space=sflag, size = 0x8, scoped, tag = 'scoped memory for tpu_custom_call.1']
    #allocation5 [shape = 'u8[8192]{0}', space=vmem, size = 0x2000, scoped, tag = 'output window, operand 0']
    %6 = vsyncpa [#allocation3], 0
    %s7 = scalar_lea.sflag [#allocation3], 1
    %8 = vsyncpa %s7, 0
    %9 = vsyncpa [#allocation4], 0
    %s10 = scalar_lea.sflag [#allocation4], 1
    %11 = vsyncpa %s10, 0
    loop: start=0, step=1, limit=4
    $region2: #{tpu_custom_call.1} parent=1 // loop_pre_header
      _
    $region3: #{tpu_custom_call.1} parent=1 // loop_header
      %s13 = sphi 0, %s17
      %p14 = scmp.ge.s32.totalorder %s13, 4
      %s23 = sphi 0, %s25
      %s26 = sphi 0, %s23
      %s27 = sphi 0, %s26
      %s43 = sphi 0, %s27
      %s49 = sphi 0, %s51
      %s52 = sphi 0, %s49
      %s53 = sphi 0, %s52
      %s69 = sphi 0, %s53
    $region4: #{tpu_custom_call.1} parent=1 // loop_header_branch
      %16 = sbr.rel (%p14) target = $region8
    $region5: #{tpu_custom_call.1} parent=1 // loop_body
      %s18 = ssub.s32 %s13, 1
      %s19 = ssub.s32 %s13, 2
      %s20 = sadd.s32 %s13, 1
      %s21 = ssub.s32 %s13, %s20
      %p22 = scmp.eq.s32.totalorder %s21, 0
      %s24 = sadd.s32 %s23, 1
      %s25 = scalar_select %p22, %s23, %s24
      %p28 = pneg %p22
      %p29 = scmp.eq.s32.totalorder %s13, 1
      %p30 = por %p28, %p29
      %p31 = scmp.ne.s32.totalorder %s23, %s26
      %p32 = scmp.eq.s32.totalorder %s13, 0
      %p33 = por %p31, %p32
      %p34 = scmp.ne.s32.totalorder %s23, %s26
      %p35 = scmp.eq.s32.totalorder %s18, 1
      %p36 = por %p34, %p35
      %p37 = scmp.ne.s32.totalorder %s26, %s27
      %p38 = scmp.eq.s32.totalorder %s18, 0
      %p39 = por %p37, %p38
      %p40 = scmp.ne.s32.totalorder %s26, %s27
      %p41 = scmp.eq.s32.totalorder %s19, 1
      %p42 = por %p40, %p41
      %p44 = scmp.ne.s32.totalorder %s27, %s43
      %p45 = scmp.eq.s32.totalorder %s19, 0
      %p46 = por %p44, %p45
      %s47 = ssub.s32 %s13, %s20
      %p48 = scmp.eq.s32.totalorder %s47, 0
      %s50 = sadd.s32 %s49, 1
      %s51 = scalar_select %p48, %s49, %s50
      %p54 = pneg %p48
      %p55 = scmp.eq.s32.totalorder %s13, 1
      %p56 = por %p54, %p55
      %p57 = scmp.ne.s32.totalorder %s49, %s52
      %p58 = scmp.eq.s32.totalorder %s13, 0
      %p59 = por %p57, %p58
      %p60 = scmp.ne.s32.totalorder %s49, %s52
      %p61 = scmp.eq.s32.totalorder %s18, 1
      %p62 = por %p60, %p61
      %p63 = scmp.ne.s32.totalorder %s52, %s53
      %p64 = scmp.eq.s32.totalorder %s18, 0
      %p65 = por %p63, %p64
      %p66 = scmp.ne.s32.totalorder %s52, %s53
      %p67 = scmp.eq.s32.totalorder %s19, 1
      %p68 = por %p66, %p67
      %p70 = scmp.ne.s32.totalorder %s53, %s69
      %p71 = scmp.eq.s32.totalorder %s19, 0
      %p72 = por %p70, %p71
      %p73 = scmp.le.s32.totalorder 1, %s13
      %p74 = scmp.lt.s32.totalorder %s13, 3
      %p75 = pnand %p73, %p74
      %p76 = pneg %p75
      // Predicated region
      $region9: #{tpu_custom_call.1} parent=5 // pred_check
        _
      $region10: #{tpu_custom_call.1} parent=5 // pred_check_branch
        %78 = sbr.rel (%p75) target = $region12
      $region11: #{tpu_custom_call.1} parent=5 // pred_region
        %s79 = ssub.s32 %s13, 1
      $region12: #{tpu_custom_call.1} parent=5 // pred_fallthru
        _
      %p80 = scmp.lt.s32.totalorder %s13, 2
      // Predicated region
      $region13: #{tpu_custom_call.1} parent=5 // pred_check
        %p81 = pneg %p80
      $region14: #{tpu_custom_call.1} parent=5 // pred_check_branch
        %83 = sbr.rel (%p81) target = $region16
      $region15: #{tpu_custom_call.1} parent=5 // pred_region
        // Predicated region
        $region17: #{tpu_custom_call.1} parent=15 // pred_check
          %p84 = pneg %p33
        $region18: #{tpu_custom_call.1} parent=15 // pred_check_branch
          %86 = sbr.rel (%p84) target = $region20
        $region19: #{tpu_custom_call.1} parent=15 // pred_region
          %s87 = sand.u32 %s23, 1
          %s88 = scalar_lea.sflag [#allocation3], %s87
          %s89 = sand.u32 %s23, 1
          %s90 = smul.addr %s89, 64
          %s91 = scalar_lea.vmem [#allocation2], %s90
          %s92 = smul.u32 8, %s13
          %94 = vsyncadd %s88, 0
          %s95 = smul.addr %s92, 8
          %s96 = scalar_lea.hbm %s0, %s95
          %s97 = sshll.u32 %s96, 4
          %s98 = int_to_ptr.hbm [resolvable:$true] %s97
          %s99 = sshll.u32 %s91, 4
          %s100 = int_to_ptr.vmem [resolvable:$true] %s99
          %105 = dma.hbm_to_vmem [thread:$0]  %s98, 1024, %s100, %s88, 128, 128, 8
        $region20: #{tpu_custom_call.1} parent=15 // pred_fallthru
          _
      $region16: #{tpu_custom_call.1} parent=5 // pred_fallthru
        _
      %p106 = scmp.le.s32.totalorder 1, %s13
      %p107 = scmp.lt.s32.totalorder %s13, 3
      %p108 = pnand %p106, %p107
      %p109 = pneg %p108
      // Predicated region
      $region21: #{tpu_custom_call.1} parent=5 // pred_check
        _
      $region22: #{tpu_custom_call.1} parent=5 // pred_check_branch
        %111 = sbr.rel (%p108) target = $region24
      $region23: #{tpu_custom_call.1} parent=5 // pred_region
        %s112 = ssub.s32 %s13, 1
        %s113 = sand.u32 %s26, 1
        %s114 = scalar_lea.sflag [#allocation3], %s113
        %s115 = sand.u32 %s26, 1
        %s116 = smul.addr %s115, 64
        %s117 = scalar_lea.vmem [#allocation2], %s116
        // Predicated region
        $region25: #{tpu_custom_call.1} parent=23 // pred_check
          %p118 = pneg %p39
        $region26: #{tpu_custom_call.1} parent=23 // pred_check_branch
          %120 = sbr.rel (%p118) target = $region28
        $region27: #{tpu_custom_call.1} parent=23 // pred_region
          %122 = dma.done %s114, 1024
        $region28: #{tpu_custom_call.1} parent=23 // pred_fallthru
          _
        %s123 = sand.u32 %s26, 1
        %s124 = scalar_lea.sflag [#allocation3], %s123
        %s125 = sand.u32 %s26, 1
        %s126 = smul.addr %s125, 64
        %s127 = scalar_lea.vmem [#allocation2], %s126
        %p128 = pneg %p39
        %p129 = pneg %p36
        %p130 = pneg %p65
        %p131 = pneg %p62
        %s132 = sand.u32 %s52, 1
        %s133 = scalar_lea.sflag [#allocation4], %s132
        %s134 = sand.u32 %s52, 1
        %s135 = smul.addr %s134, 8
        %s136 = scalar_lea.vmem [#allocation5], %s135
        %s137 = smul.u32 8, %s18
        %v138 = vld [vmem:[%s117] sm:$0xff]
        %v139 = vld [vmem:[%s117 + $0x8] sm:$0xff]
        %v140 = vld [vmem:[%s117 + $0x10] sm:$0xff]
        %v141 = vld [vmem:[%s117 + $0x18] sm:$0xff]
        %v142 = vld [vmem:[%s117 + $0x20] sm:$0xff]
        %v143 = vld [vmem:[%s117 + $0x28] sm:$0xff]
        %v144 = vld [vmem:[%s117 + $0x30] sm:$0xff]
        %v145 = vld [vmem:[%s117 + $0x38] sm:$0xff]
        %v146 = vlog2.pop %v138
        %v147 = vmul.f32 %v146, 0.6931472
        %v148 = vlog2.pop %v139
        %v149 = vmul.f32 %v148, 0.6931472
        %v150 = vlog2.pop %v140
        %v151 = vmul.f32 %v150, 0.6931472
        %v152 = vlog2.pop %v141
        %v153 = vmul.f32 %v152, 0.6931472
        %v154 = vlog2.pop %v142
        %v155 = vmul.f32 %v154, 0.6931472
        %v156 = vlog2.pop %v143
        %v157 = vmul.f32 %v156, 0.6931472
        %v158 = vlog2.pop %v144
        %v159 = vmul.f32 %v158, 0.6931472
        %v160 = vlog2.pop %v145
        %v161 = vmul.f32 %v160, 0.6931472
        %v162 = vadd.f32 %v147, %v149
        %v163 = vadd.f32 %v162, %v151
        %v164 = vadd.f32 %v163, %v153
        %v165 = vadd.f32 %v164, %v155
        %v166 = vadd.f32 %v165, %v157
        %v167 = vadd.f32 %v166, %v159
        %v168 = vadd.f32 %v167, %v161
        %v169 = vrot.slane %v168, 4
        %v170 = vadd.f32 %v168, %v169
        %v171 = vrot.slane %v170, 2
        %v172 = vadd.f32 %v170, %v171
        %v173 = vrot.slane %v172, 1
        %v174 = vadd.f32 %v172, %v173
        %175 = vst [vmem:[%s136] sm:$0xff] %v174
        %s176 = sand.u32 %s52, 1
        %s177 = scalar_lea.sflag [#allocation4], %s176
        %s178 = sand.u32 %s52, 1
        %s179 = smul.addr %s178, 8
        %s180 = scalar_lea.vmem [#allocation5], %s179
        // Predicated region
        $region29: #{tpu_custom_call.1} parent=23 // pred_check
          %p181 = pneg %p62
        $region30: #{tpu_custom_call.1} parent=23 // pred_check_branch
          %183 = sbr.rel (%p181) target = $region32
        $region31: #{tpu_custom_call.1} parent=23 // pred_region
          %185 = vsyncadd %s177, 0
          %s186 = smul.addr %s18, 8
          %s187 = scalar_lea.hbm %s1, %s186
          %s189 = sshll.u32 %s180, 4
          %s190 = int_to_ptr.vmem [resolvable:$true] %s189
          %s191 = sshll.u32 %s187, 4
          %s192 = int_to_ptr.hbm [resolvable:$true] %s191
          %194 = dma.vmem_to_hbm [thread:$0]  %s190, 128, %s192, %s177
        $region32: #{tpu_custom_call.1} parent=23 // pred_fallthru
          _
      $region24: #{tpu_custom_call.1} parent=5 // pred_fallthru
        _
      %p195 = scmp.le.s32.totalorder 2, %s13
      // Predicated region
      $region33: #{tpu_custom_call.1} parent=5 // pred_check
        %p196 = pneg %p195
      $region34: #{tpu_custom_call.1} parent=5 // pred_check_branch
        %198 = sbr.rel (%p196) target = $region36
      $region35: #{tpu_custom_call.1} parent=5 // pred_region
        %s199 = ssub.s32 %s13, 2
        // Predicated region
        $region37: #{tpu_custom_call.1} parent=35 // pred_check
          %p200 = pneg %p68
        $region38: #{tpu_custom_call.1} parent=35 // pred_check_branch
          %202 = sbr.rel (%p200) target = $region40
        $region39: #{tpu_custom_call.1} parent=35 // pred_region
          %s203 = sand.u32 %s53, 1
          %s204 = scalar_lea.sflag [#allocation4], %s203
          %s205 = sand.u32 %s53, 1
          %s206 = smul.addr %s205, 8
          %s207 = scalar_lea.vmem [#allocation5], %s206
          %209 = dma.done %s204, 128
        $region40: #{tpu_custom_call.1} parent=35 // pred_fallthru
          _
      $region36: #{tpu_custom_call.1} parent=5 // pred_fallthru
        _
    $region6: #{tpu_custom_call.1} parent=1 // loop_footer
      %s17 = sadd.s32 1, %s13
    $region7: #{tpu_custom_call.1} parent=1 // loop_footer_branch
      %12 = sbr.rel target = $region3
    $region8: #{tpu_custom_call.1} parent=1 // loop_exit
      _
    %210 = vsyncpa [#allocation3], 1
    %s211 = scalar_lea.sflag [#allocation3], 1
    %212 = vsyncpa %s211, 1
    %213 = vsyncpa [#allocation4], 1
    %s214 = scalar_lea.sflag [#allocation4], 1
    %215 = vsyncpa %s214, 1

</llo_original>
